<compile_context>
chip_gen: v6e
topology: v6e:2x2x1
jax: 0.10.0
libtpu: 0.0.40
codegen_flags: <defaults>
</compile_context>

<pallas_src>
import functools

import numpy as np
import jax
import jax.numpy as jnp
from jax.experimental import pallas as pl
from jax.experimental.pallas import tpu as pltpu

SQRT2 = np.float32(np.sqrt(2.0))


def mp_fourier_kernel(x_ref, freqs_ref, phases_ref, o_ref, *, tile_b, x_resident):
    # x_ref:      (B_pad, 1) resident column   OR  (tile_b, 1) per-step tile
    # freqs_ref:  (1, C)     resident f32 row
    # phases_ref: (1, C)     resident f32 row
    # o_ref:      (tile_b, C) lane-dense output tile
    if x_resident:
        start = pl.multiple_of(pl.program_id(0) * tile_b, tile_b)
        x = x_ref[pl.ds(start, tile_b), :]
    else:
        x = x_ref[...]
    x = x.astype(jnp.float32)                 # (tile_b, 1)
    f = freqs_ref[...]                        # (1, C), already f32
    p = phases_ref[...]                       # (1, C), already f32
    y = jnp.cos(x * f + p) * SQRT2            # broadcast outer product + phase
    o_ref[...] = y.astype(o_ref.dtype)


def mp_fourier(x, freqs, phases, *, vmem_out_tile_budget=4 * 1024 * 1024):
    """x: (B,) any float dtype; freqs, phases: (C,). Returns (B, C) in x.dtype."""
    B = x.shape[0]
    C = freqs.shape[0]
    out_dtype = x.dtype
    itemsize = jnp.dtype(out_dtype).itemsize

    # Sublane pack of the output dtype: 8 rows f32, 16 rows bf16, 32 rows int8.
    pack = max(8, 32 // itemsize)

    # Largest sublane-aligned row count whose output tile fits one VMEM buffer
    # of the budget (double-buffered by the pipeline).
    max_rows = max(pack, (vmem_out_tile_budget // (C * itemsize)) // pack * pack)
    b_pad = pl.cdiv(B, pack) * pack
    tile_b = min(b_pad, max_rows)

    # v7x: for big outputs keep >=2 parallel grid steps so the cos-bound work
    # shards across both TensorCores; tiny outputs stay a single block.
    if tile_b == b_pad and b_pad >= 2 * pack and b_pad * C >= (1 << 17):
        tile_b = pl.cdiv(b_pad // 2, pack) * pack

    b_pad = pl.cdiv(B, tile_b) * tile_b
    grid = (b_pad // tile_b,)

    x2 = x.reshape(B, 1)
    if b_pad != B:
        x2 = jnp.pad(x2, ((0, b_pad - B), (0, 0)))
    f2 = freqs.reshape(1, C).astype(jnp.float32)
    p2 = phases.reshape(1, C).astype(jnp.float32)

    # Keep x resident (DMA'd once) while its padded column layout stays small;
    # otherwise stream a (tile_b, 1) slice alongside each output tile.
    x_resident = b_pad * 512 <= 2 * 1024 * 1024
    if x_resident:
        x_spec = pl.BlockSpec((b_pad, 1), lambda i: (0, 0))
    else:
        x_spec = pl.BlockSpec((tile_b, 1), lambda i: (i, 0))

    kernel = functools.partial(mp_fourier_kernel, tile_b=tile_b, x_resident=x_resident)

    out = pl.pallas_call(
        kernel,
        out_shape=jax.ShapeDtypeStruct((b_pad, C), out_dtype),
        grid_spec=pltpu.PrefetchScalarGridSpec(
            num_scalar_prefetch=0,
            grid=grid,
            in_specs=[
                x_spec,                                   # x (resident or tiled)
                pl.BlockSpec((1, C), lambda i: (0, 0)),   # freqs (resident)
                pl.BlockSpec((1, C), lambda i: (0, 0)),   # phases (resident)
            ],
            out_specs=pl.BlockSpec((tile_b, C), lambda i: (i, 0)),
        ),
        compiler_params=pltpu.CompilerParams(
            dimension_semantics=("parallel",),
            vmem_limit_bytes=32 * 1024 * 1024,
        ),
    )(x2, f2, p2)

    return out[:B] if b_pad != B else out


if __name__ == "__main__":
    # Deterministic "module init" (register_buffer equivalents).
    num_channels = 128
    bandwidth = 1.0
    key = jax.random.PRNGKey(0)
    k_freq, k_phase, k_x = jax.random.split(key, 3)

    freqs = 2.0 * np.pi * jax.random.normal(k_freq, (num_channels,), jnp.float32) * bandwidth
    phases = 2.0 * np.pi * jax.random.uniform(k_phase, (num_channels,), jnp.float32)

    def ref_fn(x):
        y = (x[:, None].astype(jnp.float32) * freqs[None, :].astype(jnp.float32)
             + phases[None, :].astype(jnp.float32))
        return (jnp.cos(y) * np.sqrt(2.0)).astype(x.dtype)

    # f32 input with a batch that is NOT a multiple of the sublane pack
    # (exercises the cdiv/padding path instead of the old hard assert).
    B = 19
    x_f32 = jax.random.normal(k_x, (B,), jnp.float32)
    out = jax.block_until_ready(mp_fourier(x_f32, freqs, phases))
    assert out.shape == (B, num_channels) and out.dtype == x_f32.dtype
    np.testing.assert_allclose(np.asarray(out), np.asarray(ref_fn(x_f32)),
                               rtol=1e-5, atol=1e-5)

    # bf16 input: output dtype follows x, tile_b aligns to 16-row bf16 packs.
    x_bf16 = x_f32.astype(jnp.bfloat16)
    out_bf = jax.block_until_ready(mp_fourier(x_bf16, freqs, phases))
    assert out_bf.shape == (B, num_channels) and out_bf.dtype == jnp.bfloat16
    np.testing.assert_allclose(np.asarray(out_bf, dtype=np.float32),
                               np.asarray(ref_fn(x_bf16), dtype=np.float32),
                               rtol=2e-2, atol=2e-2)

    print("KERNEL_OK")
</pallas_src>

<mosaic_0001>
module attributes {stable_mosaic.version = 11 : i64} {
  func.func @mp_fourier_kernel(%arg0: i32, %arg1: memref<24x1xf32, #tpu.memory_space<vmem>>, %arg2: memref<1x128xf32, #tpu.memory_space<vmem>>, %arg3: memref<1x128xf32, #tpu.memory_space<vmem>>, %arg4: memref<24x128xf32, #tpu.memory_space<vmem>>) attributes {dimension_semantics = [#tpu.dimension_semantics<parallel>], iteration_bounds = array<i64: 1>, scalar_prefetch = 0 : i64, scratch_operands = 0 : i64, tpu.core_type = #tpu.core_type<tc>, window_params = [{pipeline_mode = #tpu.pipeline_mode<synchronous>, transform_indices = @transform_0, window_bounds = array<i64: 24, 1>}, {pipeline_mode = #tpu.pipeline_mode<synchronous>, transform_indices = @transform_1, window_bounds = array<i64: 1, 128>}, {pipeline_mode = #tpu.pipeline_mode<synchronous>, transform_indices = @transform_2, window_bounds = array<i64: 1, 128>}, {transform_indices = @transform_3, window_bounds = array<i64: 24, 128>}]} {
    %c24_i32 = arith.constant 24 : i32
    %0 = arith.muli %arg0, %c24_i32 : i32
    %1 = tpu.assume_multiple %0, 24 : i32
    %2 = arith.index_cast %1 : i32 to index
    %c0 = arith.constant 0 : index
    %3 = vector.load %arg1[%2, %c0] : memref<24x1xf32, #tpu.memory_space<vmem>>, vector<24x1xf32>
    %c0_0 = arith.constant 0 : index
    %c0_1 = arith.constant 0 : index
    %4 = vector.load %arg2[%c0_0, %c0_1] : memref<1x128xf32, #tpu.memory_space<vmem>>, vector<1x128xf32>
    %c0_2 = arith.constant 0 : index
    %c0_3 = arith.constant 0 : index
    %5 = vector.load %arg3[%c0_2, %c0_3] : memref<1x128xf32, #tpu.memory_space<vmem>>, vector<1x128xf32>
    %6 = vector.broadcast %3 : vector<24x1xf32> to vector<24x128xf32>
    %7 = vector.broadcast %4 : vector<1x128xf32> to vector<24x128xf32>
    %8 = arith.mulf %6, %7 : vector<24x128xf32>
    %9 = vector.broadcast %5 : vector<1x128xf32> to vector<24x128xf32>
    %10 = arith.addf %8, %9 : vector<24x128xf32>
    %11 = math.cos %10 : vector<24x128xf32>
    %cst = arith.constant 1.41421354 : f32
    %12 = vector.broadcast %cst : f32 to vector<24x128xf32>
    %13 = arith.mulf %11, %12 : vector<24x128xf32>
    %c0_4 = arith.constant 0 : index
    %c0_5 = arith.constant 0 : index
    %14 = vector.load %arg4[%c0_4, %c0_5] : memref<24x128xf32, #tpu.memory_space<vmem>>, vector<24x128xf32>
    tpu.vector_store %arg4[%c0_4, %c0_5], %13 {strides = array<i32>} : memref<24x128xf32, #tpu.memory_space<vmem>>, vector<24x128xf32>,
    return
  }
  func.func @transform_0(%arg0: i32) -> (i32, i32) {
    %c0_i32 = arith.constant 0 : i32
    %c0_i32_0 = arith.constant 0 : i32
    %c0_i32_1 = arith.constant 0 : i32
    return %c0_i32, %c0_i32_0 : i32, i32
  }
  func.func @transform_1(%arg0: i32) -> (i32, i32) {
    %c0_i32 = arith.constant 0 : i32
    %c0_i32_0 = arith.constant 0 : i32
    %c0_i32_1 = arith.constant 0 : i32
    return %c0_i32, %c0_i32_0 : i32, i32
  }
  func.func @transform_2(%arg0: i32) -> (i32, i32) {
    %c0_i32 = arith.constant 0 : i32
    %c0_i32_0 = arith.constant 0 : i32
    %c0_i32_1 = arith.constant 0 : i32
    return %c0_i32, %c0_i32_0 : i32, i32
  }
  func.func @transform_3(%arg0: i32) -> (i32, i32) {
    %c0_i32 = arith.constant 0 : i32
    %c0_i32_0 = arith.constant 0 : i32
    return %arg0, %c0_i32 : i32, i32
  }
}

</mosaic_0001>

<llo_original>
// kernel: tpu_custom_call.1
$region0: #{tpu_custom_call.1}
  #allocation0 [shape = 'u32[]', space=smem, size = 0x4, offset = 0x4, fixed_abs, tag = 'smem constant byte address 0x4 - core index']
  #allocation1 [shape = 'u32[144,128]{1,0:T(1,128)}', space=vmem, size = 0x12000, scoped, tag = 'internal scratch']
  %s0 = inlined_call_operand.vmem [shape: f32[24,1], index: 0, kind: input, shape index: {}]
  %s1 = inlined_call_operand.vmem [shape: f32[1,128], index: 1, kind: input, shape index: {}]
  %s2 = inlined_call_operand.vmem [shape: f32[1,128], index: 2, kind: input, shape index: {}]
  %s3 = inlined_call_operand.hbm [shape: f32[24,128], index: 3, kind: output, shape index: {}]
  %s4 = sld [smem:[#allocation0]]
  $region22: #{tpu_custom_call.1} parent=0
    _
  %s6 = ssub.s32 1, %s4
  %s7 = scalar_select 0, %s6, %s4
  $region1: #{tpu_custom_call.1} parent=0
    #allocation2 [shape = 'u8[12288]{0}', space=vmem, size = 0x3000, scoped, tag = 'output window, operand 0, single buffered']
    #allocation3 [shape = 's32[1]{0}', space=sflag, size = 0x4, scoped, tag = 'scoped memory for tpu_custom_call.1']
    %8 = vsyncpa [#allocation3], 0
    // Predicated region
    $region2: #{tpu_custom_call.1} parent=1 // pred_check
      _
    $region3: #{tpu_custom_call.1} parent=1 // pred_check_branch
      %10 = sbr.rel (0) target = $region5
    $region4: #{tpu_custom_call.1} parent=1 // pred_region
      _
    $region5: #{tpu_custom_call.1} parent=1 // pred_fallthru
      _
    // Predicated region
    $region6: #{tpu_custom_call.1} parent=1 // pred_check
      _
    $region7: #{tpu_custom_call.1} parent=1 // pred_check_branch
      %12 = sbr.rel (0) target = $region9
    $region8: #{tpu_custom_call.1} parent=1 // pred_region
      _
    $region9: #{tpu_custom_call.1} parent=1 // pred_fallthru
      _
    // Predicated region
    $region10: #{tpu_custom_call.1} parent=1 // pred_check
      _
    $region11: #{tpu_custom_call.1} parent=1 // pred_check_branch
      %14 = sbr.rel (0) target = $region13
    $region12: #{tpu_custom_call.1} parent=1 // pred_region
      _
    $region13: #{tpu_custom_call.1} parent=1 // pred_fallthru
      _
    %s15 = smul.u32 0, 24
    %s16 = scalar_lea.vmem %s0, %s15
    %v17 = vld [vmem:[%s16] sm:$0xff]
    %v18 = vld [vmem:[%s16 + $0x8] sm:$0xff]
    %v19 = vld [vmem:[%s16 + $0x10] sm:$0xff]
    %v20 = vld [vmem:[%s1] sm:$0x1]
    %v21 = vld [vmem:[%s2] sm:$0x1]
    %23 = vset.pattern.permute.xlu0 0
    %24 = vperm.xlu0 %23, %v17
    %v25 = vpop.permute.xlu0 %24
    %28 = vset.pattern.permute.xlu0 0
    %29 = vperm.xlu0 %28, %v18
    %v30 = vpop.permute.xlu0 %29
    %33 = vset.pattern.permute.xlu0 0
    %34 = vperm.xlu0 %33, %v19
    %v35 = vpop.permute.xlu0 %34
    %v38 = vlaneseq
    %v39 = vshrl.u32 %v38, 7
    %v40 = vsub.s32 0, %v39
    %v41 = vrot.slane %v20, %v40
    %v43 = vmul.f32 %v25, %v41
    %v44 = vmul.f32 %v30, %v41
    %v45 = vmul.f32 %v35, %v41
    %v47 = vlaneseq
    %v48 = vshrl.u32 %v47, 7
    %v49 = vsub.s32 0, %v48
    %v50 = vrot.slane %v21, %v49
    %v52 = vadd.f32 %v43, %v50
    %v53 = vadd.f32 %v44, %v50
    %v54 = vadd.f32 %v45, %v50
    %v55 = vand.u32 2147483647, %v52
    %vm56 = vcmp.le.f32.partialorder %v55, 0.7853982
    %vm57 = vcmp.lt.s32.totalorder %v52, 0
    %v58 = vand.u32 %v52, 2139095040
    %v59 = vshrl.u32 %v58, 23
    %v60 = vsub.s32 %v59, 127
    %v61 = vand.u32 2147483647, %v52
    %v62 = vand.u32 %v61, 8388607
    %v63 = vor.u32 %v62, 8388608
    %v64 = vsub.s32 0, %v63
    %v65 = vadd.s32 %v60, 1
    %vm66 = vcmp.gt.s32.totalorder %v65, 0
    %v67 = vsel %vm66, %v65, 0
    %v68 = vshrl.u32 %v67, 5
    %v69 = vand.u32 %v67, 31
    %v70 = vsub.s32 32, %v69
    %v71 = vshrl.u32 683565275, %v70
    %v72 = vshll.u32 683565275, %v69
    %v73 = vshrl.u32 2475754826, %v70
    %v74 = vor.u32 %v72, %v73
    %v75 = vshll.u32 2475754826, %v69
    %v76 = vshrl.u32 2131351028, %v70
    %v77 = vor.u32 %v75, %v76
    %v78 = vshll.u32 2131351028, %v69
    %v79 = vshrl.u32 2102212464, %v70
    %v80 = vor.u32 %v78, %v79
    %v81 = vshll.u32 2102212464, %v69
    %v82 = vshrl.u32 920167782, %v70
    %v83 = vor.u32 %v81, %v82
    %v84 = vshll.u32 920167782, %v69
    %v85 = vshrl.u32 1326507024, %v70
    %v86 = vor.u32 %v84, %v85
    %vm87 = vcmp.lt.s32.totalorder %v68, 1
    %vm88 = vcmp.lt.s32.totalorder %v68, 2
    %vm89 = vcmp.lt.s32.totalorder %v68, 3
    %vm90 = vcmp.lt.s32.totalorder %v68, 4
    %v91 = vsel %vm87, %v71, %v74
    %v92 = vsel %vm90, %v80, 2102212464
    %v93 = vsel %vm89, %v77, %v92
    %v94 = vsel %vm88, %v91, %v93
    %v95 = vsel %vm87, %v74, %v77
    %v96 = vsel %vm90, %v83, 920167782
    %v97 = vsel %vm89, %v80, %v96
    %v98 = vsel %vm88, %v95, %v97
    %v99 = vsel %vm87, %v77, %v80
    %v100 = vsel %vm90, %v86, 1326507024
    %v101 = vsel %vm89, %v83, %v100
    %v102 = vsel %vm88, %v99, %v101
    %v103 = vshll.u32 %v63, 8
    %v104 = vmul.u32.u64.compose %v103, %v102
    %v105 = vextract.low.u32 %v104
    %v106 = vextract.high.u32 %v104
    %v107 = vmul.u32.u64.compose %v103, %v98
    %v108 = vextract.low.u32 %v107
    %v109 = vextract.high.u32 %v107
    %v110 = vmul.u32 %v103, %v94
    %v111 = vadd.s32 %v106, %v108
    %vm112 = vc.u32 %v106, %v108
    %v113 = vadd.s32 %v109, 1
    %v114 = vsel %vm112, %v113, %v109
    %v115 = vadd.s32 %v110, %v114
    %v116 = vadd.s32 %v115, 536870912
    %v117 = vshrl.u32 %v116, 30
    %v118 = vshll.u32 %v117, 30
    %v119 = vsub.s32 %v115, %v118
    %vm120 = vcmp.lt.s32.totalorder %v119, 0
    %v121 = vsub.s32 0, %v119
    %v122 = vsel %vm120, %v121, %v119
    %v123 = vclz %v122
    %v124 = vsub.s32 %v123, 2
    %vm125 = vcmp.gt.s32.totalorder 0, %v124
    %v126 = vsel %vm125, 0, %v124
    %v127 = vsub.s32 32, %v126
    %v128 = vshll.u32 %v119, %v126
    %v129 = vshrl.u32 %v111, %v127
    %v130 = vor.u32 %v128, %v129
    %v131 = vsub.s32 4294967266, %v126
    %v132 = vadd.s32 %v131, 127
    %v133 = vshll.u32 %v132, 23
    %v134 = vor.u32 4788187, %v133
    %v135 = vand.u32 2147483647, %v134
    %v137 = vcvt.s32.f32 %v130
    %v138 = vmul.f32 %v137, %v135
    %v139 = vxor.u32 %v138, 2147483648
    %v140 = vsel %vm57, %v139, %v138
    %v141 = vsub.s32 4, %v117
    %v142 = vsel %vm57, %v141, %v117
    %v143 = vsel %vm56, %v52, %v140
    %v144 = vsel %vm56, 0, %v142
    %v145 = vcosq.f32.pop %v143
    %v146 = vsinq.f32.pop %v143
    %vm147 = vweird.f32 %v52
    %v148 = vand.u32 %v144, 3
    %vm149 = vcmp.lt.s32.totalorder %v148, 2
    %vm150 = vcmp.eq.s32.totalorder %v148, 0
    %v151 = vxor.u32 %v146, 2147483648
    %v152 = vsel %vm150, %v145, %v151
    %vm153 = vcmp.eq.s32.totalorder %v148, 2
    %v154 = vxor.u32 %v145, 2147483648
    %v155 = vsel %vm153, %v154, %v146
    %v156 = vsel %vm149, %v152, %v155
    %v157 = vsel %vm147, nan, %v156
    %v158 = vand.u32 2147483647, %v53
    %vm159 = vcmp.le.f32.partialorder %v158, 0.7853982
    %vm160 = vcmp.lt.s32.totalorder %v53, 0
    %v161 = vand.u32 %v53, 2139095040
    %v162 = vshrl.u32 %v161, 23
    %v163 = vsub.s32 %v162, 127
    %v164 = vand.u32 2147483647, %v53
    %v165 = vand.u32 %v164, 8388607
    %v166 = vor.u32 %v165, 8388608
    %v167 = vsub.s32 0, %v166
    %v168 = vadd.s32 %v163, 1
    %vm169 = vcmp.gt.s32.totalorder %v168, 0
    %v170 = vsel %vm169, %v168, 0
    %v171 = vshrl.u32 %v170, 5
    %v172 = vand.u32 %v170, 31
    %v173 = vsub.s32 32, %v172
    %v174 = vshrl.u32 683565275, %v173
    %v175 = vshll.u32 683565275, %v172
    %v176 = vshrl.u32 2475754826, %v173
    %v177 = vor.u32 %v175, %v176
    %v178 = vshll.u32 2475754826, %v172
    %v179 = vshrl.u32 2131351028, %v173
    %v180 = vor.u32 %v178, %v179
    %v181 = vshll.u32 2131351028, %v172
    %v182 = vshrl.u32 2102212464, %v173
    %v183 = vor.u32 %v181, %v182
    %v184 = vshll.u32 2102212464, %v172
    %v185 = vshrl.u32 920167782, %v173
    %v186 = vor.u32 %v184, %v185
    %v187 = vshll.u32 920167782, %v172
    %v188 = vshrl.u32 1326507024, %v173
    %v189 = vor.u32 %v187, %v188
    %vm190 = vcmp.lt.s32.totalorder %v171, 1
    %vm191 = vcmp.lt.s32.totalorder %v171, 2
    %vm192 = vcmp.lt.s32.totalorder %v171, 3
    %vm193 = vcmp.lt.s32.totalorder %v171, 4
    %v194 = vsel %vm190, %v174, %v177
    %v195 = vsel %vm193, %v183, 2102212464
    %v196 = vsel %vm192, %v180, %v195
    %v197 = vsel %vm191, %v194, %v196
    %v198 = vsel %vm190, %v177, %v180
    %v199 = vsel %vm193, %v186, 920167782
    %v200 = vsel %vm192, %v183, %v199
    %v201 = vsel %vm191, %v198, %v200
    %v202 = vsel %vm190, %v180, %v183
    %v203 = vsel %vm193, %v189, 1326507024
    %v204 = vsel %vm192, %v186, %v203
    %v205 = vsel %vm191, %v202, %v204
    %v206 = vshll.u32 %v166, 8
    %v207 = vmul.u32.u64.compose %v206, %v205
    %v208 = vextract.low.u32 %v207
    %v209 = vextract.high.u32 %v207
    %v210 = vmul.u32.u64.compose %v206, %v201
    %v211 = vextract.low.u32 %v210
    %v212 = vextract.high.u32 %v210
    %v213 = vmul.u32 %v206, %v197
    %v214 = vadd.s32 %v209, %v211
    %vm215 = vc.u32 %v209, %v211
    %v216 = vadd.s32 %v212, 1
    %v217 = vsel %vm215, %v216, %v212
    %v218 = vadd.s32 %v213, %v217
    %v219 = vadd.s32 %v218, 536870912
    %v220 = vshrl.u32 %v219, 30
    %v221 = vshll.u32 %v220, 30
    %v222 = vsub.s32 %v218, %v221
    %vm223 = vcmp.lt.s32.totalorder %v222, 0
    %v224 = vsub.s32 0, %v222
    %v225 = vsel %vm223, %v224, %v222
    %v226 = vclz %v225
    %v227 = vsub.s32 %v226, 2
    %vm228 = vcmp.gt.s32.totalorder 0, %v227
    %v229 = vsel %vm228, 0, %v227
    %v230 = vsub.s32 32, %v229
    %v231 = vshll.u32 %v222, %v229
    %v232 = vshrl.u32 %v214, %v230
    %v233 = vor.u32 %v231, %v232
    %v234 = vsub.s32 4294967266, %v229
    %v235 = vadd.s32 %v234, 127
    %v236 = vshll.u32 %v235, 23
    %v237 = vor.u32 4788187, %v236
    %v238 = vand.u32 2147483647, %v237
    %v240 = vcvt.s32.f32 %v233
    %v241 = vmul.f32 %v240, %v238
    %v242 = vxor.u32 %v241, 2147483648
    %v243 = vsel %vm160, %v242, %v241
    %v244 = vsub.s32 4, %v220
    %v245 = vsel %vm160, %v244, %v220
    %v246 = vsel %vm159, %v53, %v243
    %v247 = vsel %vm159, 0, %v245
    %v248 = vcosq.f32.pop %v246
    %v249 = vsinq.f32.pop %v246
    %vm250 = vweird.f32 %v53
    %v251 = vand.u32 %v247, 3
    %vm252 = vcmp.lt.s32.totalorder %v251, 2
    %vm253 = vcmp.eq.s32.totalorder %v251, 0
    %v254 = vxor.u32 %v249, 2147483648
    %v255 = vsel %vm253, %v248, %v254
    %vm256 = vcmp.eq.s32.totalorder %v251, 2
    %v257 = vxor.u32 %v248, 2147483648
    %v258 = vsel %vm256, %v257, %v249
    %v259 = vsel %vm252, %v255, %v258
    %v260 = vsel %vm250, nan, %v259
    %v261 = vand.u32 2147483647, %v54
    %vm262 = vcmp.le.f32.partialorder %v261, 0.7853982
    %vm263 = vcmp.lt.s32.totalorder %v54, 0
    %v264 = vand.u32 %v54, 2139095040
    %v265 = vshrl.u32 %v264, 23
    %v266 = vsub.s32 %v265, 127
    %v267 = vand.u32 2147483647, %v54
    %v268 = vand.u32 %v267, 8388607
    %v269 = vor.u32 %v268, 8388608
    %v270 = vsub.s32 0, %v269
    %v271 = vadd.s32 %v266, 1
    %vm272 = vcmp.gt.s32.totalorder %v271, 0
    %v273 = vsel %vm272, %v271, 0
    %v274 = vshrl.u32 %v273, 5
    %v275 = vand.u32 %v273, 31
    %v276 = vsub.s32 32, %v275
    %v277 = vshrl.u32 683565275, %v276
    %v278 = vshll.u32 683565275, %v275
    %v279 = vshrl.u32 2475754826, %v276
    %v280 = vor.u32 %v278, %v279
    %v281 = vshll.u32 2475754826, %v275
    %v282 = vshrl.u32 2131351028, %v276
    %v283 = vor.u32 %v281, %v282
    %v284 = vshll.u32 2131351028, %v275
    %v285 = vshrl.u32 2102212464, %v276
    %v286 = vor.u32 %v284, %v285
    %v287 = vshll.u32 2102212464, %v275
    %v288 = vshrl.u32 920167782, %v276
    %v289 = vor.u32 %v287, %v288
    %v290 = vshll.u32 920167782, %v275
    %v291 = vshrl.u32 1326507024, %v276
    %v292 = vor.u32 %v290, %v291
    %vm293 = vcmp.lt.s32.totalorder %v274, 1
    %vm294 = vcmp.lt.s32.totalorder %v274, 2
    %vm295 = vcmp.lt.s32.totalorder %v274, 3
    %vm296 = vcmp.lt.s32.totalorder %v274, 4
    %v297 = vsel %vm293, %v277, %v280
    %v298 = vsel %vm296, %v286, 2102212464
    %v299 = vsel %vm295, %v283, %v298
    %v300 = vsel %vm294, %v297, %v299
    %v301 = vsel %vm293, %v280, %v283
    %v302 = vsel %vm296, %v289, 920167782
    %v303 = vsel %vm295, %v286, %v302
    %v304 = vsel %vm294, %v301, %v303
    %v305 = vsel %vm293, %v283, %v286
    %v306 = vsel %vm296, %v292, 1326507024
    %v307 = vsel %vm295, %v289, %v306
    %v308 = vsel %vm294, %v305, %v307
    %v309 = vshll.u32 %v269, 8
    %v310 = vmul.u32.u64.compose %v309, %v308
    %v311 = vextract.low.u32 %v310
    %v312 = vextract.high.u32 %v310
    %v313 = vmul.u32.u64.compose %v309, %v304
    %v314 = vextract.low.u32 %v313
    %v315 = vextract.high.u32 %v313
    %v316 = vmul.u32 %v309, %v300
    %v317 = vadd.s32 %v312, %v314
    %vm318 = vc.u32 %v312, %v314
    %v319 = vadd.s32 %v315, 1
    %v320 = vsel %vm318, %v319, %v315
    %v321 = vadd.s32 %v316, %v320
    %v322 = vadd.s32 %v321, 536870912
    %v323 = vshrl.u32 %v322, 30
    %v324 = vshll.u32 %v323, 30
    %v325 = vsub.s32 %v321, %v324
    %vm326 = vcmp.lt.s32.totalorder %v325, 0
    %v327 = vsub.s32 0, %v325
    %v328 = vsel %vm326, %v327, %v325
    %v329 = vclz %v328
    %v330 = vsub.s32 %v329, 2
    %vm331 = vcmp.gt.s32.totalorder 0, %v330
    %v332 = vsel %vm331, 0, %v330
    %v333 = vsub.s32 32, %v332
    %v334 = vshll.u32 %v325, %v332
    %v335 = vshrl.u32 %v317, %v333
    %v336 = vor.u32 %v334, %v335
    %v337 = vsub.s32 4294967266, %v332
    %v338 = vadd.s32 %v337, 127
    %v339 = vshll.u32 %v338, 23
    %v340 = vor.u32 4788187, %v339
    %v341 = vand.u32 2147483647, %v340
    %v343 = vcvt.s32.f32 %v336
    %v344 = vmul.f32 %v343, %v341
    %v345 = vxor.u32 %v344, 2147483648
    %v346 = vsel %vm263, %v345, %v344
    %v347 = vsub.s32 4, %v323
    %v348 = vsel %vm263, %v347, %v323
    %v349 = vsel %vm262, %v54, %v346
    %v350 = vsel %vm262, 0, %v348
    %v351 = vcosq.f32.pop %v349
    %v352 = vsinq.f32.pop %v349
    %vm353 = vweird.f32 %v54
    %v354 = vand.u32 %v350, 3
    %vm355 = vcmp.lt.s32.totalorder %v354, 2
    %vm356 = vcmp.eq.s32.totalorder %v354, 0
    %v357 = vxor.u32 %v352, 2147483648
    %v358 = vsel %vm356, %v351, %v357
    %vm359 = vcmp.eq.s32.totalorder %v354, 2
    %v360 = vxor.u32 %v351, 2147483648
    %v361 = vsel %vm359, %v360, %v352
    %v362 = vsel %vm355, %v358, %v361
    %v363 = vsel %vm353, nan, %v362
    %v364 = vmul.f32 %v157, 1.4142135
    %v365 = vmul.f32 %v260, 1.4142135
    %v366 = vmul.f32 %v363, 1.4142135
    %367 = vst [vmem:[#allocation2] sm:$0xff] %v364
    %368 = vst [vmem:[#allocation2 + $0x8] sm:$0xff] %v365
    %369 = vst [vmem:[#allocation2 + $0x10] sm:$0xff] %v366
    // Predicated region
    $region14: #{tpu_custom_call.1} parent=1 // pred_check
      _
    $region15: #{tpu_custom_call.1} parent=1 // pred_check_branch
      %371 = sbr.rel (0) target = $region17
    $region16: #{tpu_custom_call.1} parent=1 // pred_region
      %s373 = ssub.s32 384, 384
      %374 = vsyncadd [#allocation3], %s373
      %s375 = sshll.u32 [#allocation2], 4
      %s376 = int_to_ptr.vmem [resolvable:$true] %s375
      %381 = dma.vmem_to_hbm [thread:$0]  %s376, 384, %s3, [#allocation3], 128, 128, 8
    $region17: #{tpu_custom_call.1} parent=1 // pred_fallthru
      _
    // Predicated region
    $region18: #{tpu_custom_call.1} parent=1 // pred_check
      _
    $region19: #{tpu_custom_call.1} parent=1 // pred_check_branch
      %383 = sbr.rel (0) target = $region21
    $region20: #{tpu_custom_call.1} parent=1 // pred_region
      %384 = dma.done [#allocation3], 384
    $region21: #{tpu_custom_call.1} parent=1 // pred_fallthru
      _
    %385 = vsyncpa [#allocation3], 1

</llo_original>
